<compile_context>
chip_gen: v5e
topology: v5e:2x2
jax: 0.10.0
libtpu: 0.0.40
codegen_flags: <defaults>
</compile_context>

<pallas_src>
import functools

import jax
import jax.numpy as jnp
from jax.experimental import pallas as pl
from jax.experimental.pallas import tpu as pltpu

LANES = 128
# (4096, 128) f32 tile = 2 MiB per input; double-buffered x 2 inputs = 8 MiB.
MAX_BLOCK_ROWS = 4096


def _round_up(a: int, m: int) -> int:
    return ((a + m - 1) // m) * m


def _focal_loss_kernel(x_ref, t_ref, out_ref, *, gamma, gamma_int,
                       assume_binary_targets, approx_reciprocal,
                       block_rows, n_last_valid):
    i = pl.program_id(0)
    last = pl.num_programs(0) - 1

    x = x_ref[...].astype(jnp.float32)
    t = t_ref[...].astype(jnp.float32)

    # --- BCE-with-logits term.  Exact rewrite of
    #       max_val + log(exp(-max_val) + exp(-x - max_val)),  max_val=max(-x,0)
    #     as max(-x,0) + log1p(exp(-|x|))  -> 2 transcendentals. ---
    e_x = jnp.exp(-jnp.abs(x))                                   # EUP: exp
    loss = x - x * t + jnp.maximum(-x, 0.0) + jnp.log1p(e_x)     # EUP: log1p

    # --- focal weight = exp(gamma * logsigmoid(z)),  z = -x*(2t-1) ---
    z = -x * (t * 2.0 - 1.0)                                     # VPU only

    if gamma_int == 0:
        pass  # weight == 1 exactly
    elif gamma_int is not None:
        # Integer-gamma fast path: weight = sigmoid(z)**gamma.
        # Hard 0/1 targets => |z| == |x|, reuse e_x (drops one exp); opt-in.
        e_z = e_x if assume_binary_targets else jnp.exp(-jnp.abs(z))
        denom = 1.0 + e_z                     # in [1, 2]
        if approx_reciprocal:
            r = pl.reciprocal(denom, approx=True)   # EUP vrcp, cheap
        else:
            r = 1.0 / denom
        # Numerically stable sigmoid(z): 1/(1+e^-z) for z>0, e^z/(1+e^z) else.
        s = jnp.where(z > 0.0, r, e_z * r)
        w = s
        for _ in range(gamma_int - 1):        # repeated multiply (VPU)
            w = w * s
        loss = w * loss
    else:
        # General (non-integer gamma) path: stable logsigmoid + exp.
        e_z = e_x if assume_binary_targets else jnp.exp(-jnp.abs(z))
        invprobs = jnp.minimum(z, 0.0) - jnp.log1p(e_z)
        loss = jnp.exp(invprobs * gamma) * loss

    def fold_and_store(vals):
        # (block_rows, 128) -> (block_rows//8, 8, 128) is a vreg-aligned split,
        # so the sum over axis 0 is pure VPU adds (no per-step XLU reduce).
        out_ref[...] = jnp.sum(vals.reshape(block_rows // 8, 8, LANES), axis=0)

    if n_last_valid == block_rows * LANES:
        # Grid divides the array exactly: no masking needed anywhere.
        fold_and_store(loss)
    else:
        @pl.when(i != last)
        def _():
            fold_and_store(loss)

        @pl.when(i == last)
        def _():
            # Only the final tile can contain out-of-bounds rows.  Block-local
            # indices stay <= block_rows*128 <= 2^19, far from int32 overflow.
            # NOTE: must stay a *select* (jnp.where), never a multiply, so
            # NaN/Inf from garbage reads cannot leak into the sum.
            row_ids = jax.lax.broadcasted_iota(jnp.int32, loss.shape, 0)
            col_ids = jax.lax.broadcasted_iota(jnp.int32, loss.shape, 1)
            local_idx = row_ids * LANES + col_ids
            fold_and_store(jnp.where(local_idx < n_last_valid, loss, 0.0))


def _focal_loss_elements(x, t, gamma):
    """Stable per-element focal loss (plain JAX) — used for the <128-elem tail."""
    x = x.astype(jnp.float32)
    t = t.astype(jnp.float32)
    loss = x - x * t + jnp.maximum(-x, 0.0) + jnp.log1p(jnp.exp(-jnp.abs(x)))
    invprobs = jax.nn.log_sigmoid(-x * (t * 2.0 - 1.0))
    return jnp.exp(invprobs * gamma) * loss


def focal_loss(x, target, gamma, *, assume_binary_targets=False,
               approx_reciprocal=True, max_block_rows=MAX_BLOCK_ROWS):
    """Binary focal loss on logits (mean over all elements).

    Notes:
      * `gamma` is a static hyperparameter.  Small integer gamma (0..8) takes
        a cheaper sigmoid**gamma path; the approx reciprocal there changes the
        result by ~1e-4 relative — pass approx_reciprocal=False for bit-tight
        parity with the PyTorch formula.
      * `assume_binary_targets=True` is an opt-in specialization that is exact
        only for hard 0/1 labels (reuses exp(-|x|), saving one transcendental).
      * Inputs may be bf16 (logits and targets); the f32 cast happens in-kernel,
        which roughly halves HBM traffic on bandwidth-bound v5e/v6e.
    """
    if x.shape != target.shape:
        raise ValueError(
            "Target size ({}) must be the same as input size ({})".format(
                target.shape, x.shape))

    gamma = float(gamma)
    gamma_round = int(round(gamma))
    gamma_int = gamma_round if (gamma == float(gamma_round)
                                and 0 <= gamma_round <= 8) else None

    n = x.size
    xf = x.reshape(-1)          # native dtype; f32 cast happens in-kernel
    tf = target.reshape(-1)

    # Lane-aligned main region + tiny ragged tail (no full-array jnp.pad).
    n_main = (n // LANES) * LANES
    tail = n - n_main

    tail_sum = jnp.float32(0.0)
    if tail:
        tail_sum = jnp.sum(_focal_loss_elements(xf[n_main:], tf[n_main:], gamma))

    if n_main == 0:
        return tail_sum / n

    if tail:
        x2 = xf[:n_main].reshape(n_main // LANES, LANES)
        t2 = tf[:n_main].reshape(n_main // LANES, LANES)
    else:
        x2 = xf.reshape(n_main // LANES, LANES)   # reshape-only, no copy
        t2 = tf.reshape(n_main // LANES, LANES)
    rows = n_main // LANES

    # block_rows is always a multiple of 8; the last grid block may run past
    # `rows` (Pallas handles the ragged boundary; the kernel masks it).
    block_rows = min(max_block_rows, _round_up(rows, 8))
    # Keep >= 2 grid steps when possible so the "parallel" axis can shard
    # across both v7x TensorCores (harmless on 1-TC v5e/v6e).
    if pl.cdiv(rows, block_rows) < 2 and rows > 8:
        block_rows = _round_up(pl.cdiv(rows, 2), 8)
    num_blocks = pl.cdiv(rows, block_rows)
    n_last_valid = n_main - (num_blocks - 1) * block_rows * LANES

    partials = pl.pallas_call(
        functools.partial(
            _focal_loss_kernel,
            gamma=gamma,
            gamma_int=gamma_int,
            assume_binary_targets=bool(assume_binary_targets),
            approx_reciprocal=bool(approx_reciprocal),
            block_rows=block_rows,
            n_last_valid=int(n_last_valid),
        ),
        out_shape=jax.ShapeDtypeStruct((num_blocks * 8, LANES), jnp.float32),
        grid=(num_blocks,),
        in_specs=[
            pl.BlockSpec((block_rows, LANES), lambda i: (i, 0)),
            pl.BlockSpec((block_rows, LANES), lambda i: (i, 0)),
        ],
        # Lane-dense (8,128) partial per grid step: no resident accumulator,
        # no masked sub-128-lane stores, grid stays fully parallel.
        out_specs=pl.BlockSpec((8, LANES), lambda i: (i, 0)),
        compiler_params=pltpu.CompilerParams(
            dimension_semantics=("parallel",),
            vmem_limit_bytes=32 * 1024 * 1024,   # explicit: safe on v5e too
        ),
    )(x2, t2)

    # Single cheap cross-lane reduce + mean outside the kernel.
    return (jnp.sum(partials) + tail_sum) / n


def _reference_focal_loss(x, t, gamma):
    # Mirrors the PyTorch module exactly (pure JAX).
    x = x.astype(jnp.float32)
    t = t.astype(jnp.float32)
    max_val = jnp.maximum(-x, 0.0)
    loss = x - x * t + max_val + jnp.log(jnp.exp(-max_val) + jnp.exp(-x - max_val))
    invprobs = jax.nn.log_sigmoid(-x * (t * 2.0 - 1.0))
    loss = jnp.exp(invprobs * gamma) * loss
    return jnp.mean(loss)


if __name__ == "__main__":
    gamma = 2.0  # FocalLoss(gamma) hyperparameter (deterministic, in-script)

    key = jax.random.PRNGKey(0)
    kx, kt, kx2, kt2 = jax.random.split(key, 4)
    # Small segmentation-style shape: batch=2, channels=4, spatial=16x16 (NCHW logits)
    x = jax.random.normal(kx, (2, 4, 16, 16), dtype=jnp.float32)
    target = jax.random.bernoulli(kt, p=0.3, shape=(2, 4, 16, 16)).astype(jnp.float32)
    ref = _reference_focal_loss(x, target, gamma)

    # 1) Default config: integer-gamma fast path + approx reciprocal.
    out = jax.block_until_ready(focal_loss(x, target, gamma))
    assert jnp.allclose(out, ref, rtol=1e-2, atol=1e-5), (out, ref)

    # 2) Exact-reciprocal integer-gamma path (tight check).
    out_exact = jax.block_until_ready(
        focal_loss(x, target, gamma, approx_reciprocal=False))
    assert jnp.allclose(out_exact, ref, rtol=2e-5, atol=1e-6), (out_exact, ref)

    # 3) Opt-in binary-target specialization (targets here ARE hard 0/1 -> exact).
    out_bin = jax.block_until_ready(
        focal_loss(x, target, gamma, assume_binary_targets=True,
                   approx_reciprocal=False))
    assert jnp.allclose(out_bin, ref, rtol=2e-5, atol=1e-6), (out_bin, ref)

    # 4) Non-integer gamma exercises the general logsigmoid/exp path.
    ref_frac = _reference_focal_loss(x, target, 2.5)
    out_frac = jax.block_until_ready(focal_loss(x, target, 2.5))
    assert jnp.allclose(out_frac, ref_frac, rtol=2e-5, atol=1e-6), (out_frac, ref_frac)

    # 5) Lane-unaligned shape exercises the (pad-free) tail + ragged-block paths.
    x_odd = jax.random.normal(kx2, (3, 5, 7, 11), dtype=jnp.float32)
    t_odd = jax.random.bernoulli(kt2, p=0.3, shape=(3, 5, 7, 11)).astype(jnp.float32)
    ref_odd = _reference_focal_loss(x_odd, t_odd, gamma)
    out_odd = jax.block_until_ready(
        focal_loss(x_odd, t_odd, gamma, approx_reciprocal=False))
    assert jnp.allclose(out_odd, ref_odd, rtol=2e-5, atol=1e-6), (out_odd, ref_odd)

    print("KERNEL_OK")
</pallas_src>

<mosaic_0001>
module attributes {stable_mosaic.version = 11 : i64} {
  func.func @_focal_loss_kernel(%arg0: i32, %arg1: memref<8x128xf32, #tpu.memory_space<vmem>>, %arg2: memref<8x128xf32, #tpu.memory_space<vmem>>, %arg3: memref<8x128xf32, #tpu.memory_space<vmem>>) attributes {dimension_semantics = [#tpu.dimension_semantics<parallel>], iteration_bounds = array<i64: 2>, scalar_prefetch = 0 : i64, scratch_operands = 0 : i64, tpu.core_type = #tpu.core_type<tc>, window_params = [{transform_indices = @transform_0, window_bounds = array<i64: 8, 128>}, {transform_indices = @transform_1, window_bounds = array<i64: 8, 128>}, {transform_indices = @transform_2, window_bounds = array<i64: 8, 128>}]} {
    %c0 = arith.constant 0 : index
    %c0_0 = arith.constant 0 : index
    %0 = vector.load %arg1[%c0, %c0_0] : memref<8x128xf32, #tpu.memory_space<vmem>>, vector<8x128xf32>
    %c0_1 = arith.constant 0 : index
    %c0_2 = arith.constant 0 : index
    %1 = vector.load %arg2[%c0_1, %c0_2] : memref<8x128xf32, #tpu.memory_space<vmem>>, vector<8x128xf32>
    %2 = math.absf %0 : vector<8x128xf32>
    %cst = arith.constant 0.000000e+00 : f32
    %3 = vector.broadcast %cst : f32 to vector<8x128xf32>
    %4 = arith.subf %3, %2 : vector<8x128xf32>
    %5 = math.exp %4 : vector<8x128xf32>
    %6 = arith.mulf %0, %1 : vector<8x128xf32>
    %7 = arith.subf %0, %6 : vector<8x128xf32>
    %cst_3 = arith.constant 0.000000e+00 : f32
    %8 = vector.broadcast %cst_3 : f32 to vector<8x128xf32>
    %9 = arith.subf %8, %0 : vector<8x128xf32>
    %cst_4 = arith.constant 0.000000e+00 : f32
    %10 = vector.broadcast %cst_4 : f32 to vector<8x128xf32>
    %11 = arith.maximumf %9, %10 : vector<8x128xf32>
    %12 = arith.addf %7, %11 : vector<8x128xf32>
    %13 = math.log1p %5 : vector<8x128xf32>
    %14 = arith.addf %12, %13 : vector<8x128xf32>
    %cst_5 = arith.constant 0.000000e+00 : f32
    %15 = vector.broadcast %cst_5 : f32 to vector<8x128xf32>
    %16 = arith.subf %15, %0 : vector<8x128xf32>
    %cst_6 = arith.constant 2.000000e+00 : f32
    %17 = vector.broadcast %cst_6 : f32 to vector<8x128xf32>
    %18 = arith.mulf %1, %17 : vector<8x128xf32>
    %cst_7 = arith.constant 1.000000e+00 : f32
    %19 = vector.broadcast %cst_7 : f32 to vector<8x128xf32>
    %20 = arith.subf %18, %19 : vector<8x128xf32>
    %21 = arith.mulf %16, %20 : vector<8x128xf32>
    %22 = math.absf %21 : vector<8x128xf32>
    %cst_8 = arith.constant 0.000000e+00 : f32
    %23 = vector.broadcast %cst_8 : f32 to vector<8x128xf32>
    %24 = arith.subf %23, %22 : vector<8x128xf32>
    %25 = math.exp %24 : vector<8x128xf32>
    %cst_9 = arith.constant 1.000000e+00 : f32
    %26 = vector.broadcast %cst_9 : f32 to vector<8x128xf32>
    %27 = arith.addf %26, %25 : vector<8x128xf32>
    %28 = tpu.reciprocal %27 {approx = true} : vector<8x128xf32> -> vector<8x128xf32>
    %cst_10 = arith.constant 0.000000e+00 : f32
    %29 = vector.broadcast %cst_10 : f32 to vector<8x128xf32>
    %30 = arith.cmpf ogt, %21, %29 : vector<8x128xf32>
    %31 = arith.mulf %25, %28 : vector<8x128xf32>
    %32 = arith.select %30, %28, %31 : vector<8x128xi1>, vector<8x128xf32>
    %33 = arith.mulf %32, %32 : vector<8x128xf32>
    %34 = arith.mulf %33, %14 : vector<8x128xf32>
    %35 = vector.shape_cast %34 : vector<8x128xf32> to vector<1x8x128xf32>
    %cst_11 = arith.constant dense<0.000000e+00> : vector<8x128xf32>
    %36 = vector.multi_reduction <add>, %35, %cst_11 [0] : vector<1x8x128xf32> to vector<8x128xf32>
    %c0_12 = arith.constant 0 : index
    %c0_13 = arith.constant 0 : index
    %37 = vector.load %arg3[%c0_12, %c0_13] : memref<8x128xf32, #tpu.memory_space<vmem>>, vector<8x128xf32>
    tpu.vector_store %arg3[%c0_12, %c0_13], %36 {strides = array<i32>} : memref<8x128xf32, #tpu.memory_space<vmem>>, vector<8x128xf32>,
    return
  }
  func.func @transform_0(%arg0: i32) -> (i32, i32) {
    %c0_i32 = arith.constant 0 : i32
    %c0_i32_0 = arith.constant 0 : i32
    return %arg0, %c0_i32 : i32, i32
  }
  func.func @transform_1(%arg0: i32) -> (i32, i32) {
    %c0_i32 = arith.constant 0 : i32
    %c0_i32_0 = arith.constant 0 : i32
    return %arg0, %c0_i32 : i32, i32
  }
  func.func @transform_2(%arg0: i32) -> (i32, i32) {
    %c0_i32 = arith.constant 0 : i32
    %c0_i32_0 = arith.constant 0 : i32
    return %arg0, %c0_i32 : i32, i32
  }
}

</mosaic_0001>

<llo_original>
// kernel: tpu_custom_call.1
$region0: #{tpu_custom_call.1}
  #allocation0 [shape = 'u32[]', space=smem, size = 0x4, offset = 0x4, fixed_abs, tag = 'smem constant byte address 0x4 - core index']
  #allocation1 [shape = 'u32[72,128]{1,0:T(1,128)}', space=vmem, size = 0x9000, scoped, tag = 'internal scratch']
  %s0 = inlined_call_operand.hbm [shape: f32[16,128], index: 0, kind: input, shape index: {}]
  %s1 = inlined_call_operand.hbm [shape: f32[16,128], index: 1, kind: input, shape index: {}]
  %s2 = inlined_call_operand.hbm [shape: f32[16,128], index: 2, kind: output, shape index: {}]
  %s3 = sld [smem:[#allocation0]]
  $region49: #{tpu_custom_call.1} parent=0
    _
  %s5 = ssub.s32 1, %s3
  %s6 = scalar_select 0, %s5, %s3
  $region1: #{tpu_custom_call.1} parent=0
    #allocation2 [shape = 'u8[8192]{0}', space=vmem, size = 0x2000, scoped, tag = 'input window, operand 0']
    #allocation3 [shape = 's32[2]{0}', space=sflag, size = 0x8, scoped, tag = 'scoped memory for tpu_custom_call.1']
    #allocation4 [shape = 's32[2]{0}', space=sflag, size = 0x8, scoped, tag = 'scoped memory for tpu_custom_call.1']
    #allocation5 [shape = 'u8[8192]{0}', space=vmem, size = 0x2000, scoped, tag = 'input window, operand 1']
    #allocation6 [shape = 's32[2]{0}', space=sflag, size = 0x8, scoped, tag = 'scoped memory for tpu_custom_call.1']
    #allocation7 [shape = 'u8[8192]{0}', space=vmem, size = 0x2000, scoped, tag = 'output window, operand 0']
    %7 = vsyncpa [#allocation3], 0
    %s8 = scalar_lea.sflag [#allocation3], 1
    %9 = vsyncpa %s8, 0
    %10 = vsyncpa [#allocation6], 0
    %s11 = scalar_lea.sflag [#allocation6], 1
    %12 = vsyncpa %s11, 0
    %13 = vsyncpa [#allocation4], 0
    %s14 = scalar_lea.sflag [#allocation4], 1
    %15 = vsyncpa %s14, 0
    loop: start=0, step=1, limit=4
    $region2: #{tpu_custom_call.1} parent=1 // loop_pre_header
      _
    $region3: #{tpu_custom_call.1} parent=1 // loop_header
      %s17 = sphi 0, %s21
      %p18 = scmp.ge.s32.totalorder %s17, 4
      %s27 = sphi 0, %s29
      %s30 = sphi 0, %s27
      %s31 = sphi 0, %s30
      %s47 = sphi 0, %s31
      %s53 = sphi 0, %s55
      %s56 = sphi 0, %s53
      %s57 = sphi 0, %s56
      %s73 = sphi 0, %s57
      %s79 = sphi 0, %s81
      %s82 = sphi 0, %s79
      %s83 = sphi 0, %s82
      %s99 = sphi 0, %s83
    $region4: #{tpu_custom_call.1} parent=1 // loop_header_branch
      %20 = sbr.rel (%p18) target = $region8
    $region5: #{tpu_custom_call.1} parent=1 // loop_body
      %s22 = ssub.s32 %s17, 1
      %s23 = ssub.s32 %s17, 2
      %s24 = sadd.s32 %s17, 1
      %s25 = ssub.s32 %s17, %s24
      %p26 = scmp.eq.s32.totalorder %s25, 0
      %s28 = sadd.s32 %s27, 1
      %s29 = scalar_select %p26, %s27, %s28
      %p32 = pneg %p26
      %p33 = scmp.eq.s32.totalorder %s17, 1
      %p34 = por %p32, %p33
      %p35 = scmp.ne.s32.totalorder %s27, %s30
      %p36 = scmp.eq.s32.totalorder %s17, 0
      %p37 = por %p35, %p36
      %p38 = scmp.ne.s32.totalorder %s27, %s30
      %p39 = scmp.eq.s32.totalorder %s22, 1
      %p40 = por %p38, %p39
      %p41 = scmp.ne.s32.totalorder %s30, %s31
      %p42 = scmp.eq.s32.totalorder %s22, 0
      %p43 = por %p41, %p42
      %p44 = scmp.ne.s32.totalorder %s30, %s31
      %p45 = scmp.eq.s32.totalorder %s23, 1
      %p46 = por %p44, %p45
      %p48 = scmp.ne.s32.totalorder %s31, %s47
      %p49 = scmp.eq.s32.totalorder %s23, 0
      %p50 = por %p48, %p49
      %s51 = ssub.s32 %s17, %s24
      %p52 = scmp.eq.s32.totalorder %s51, 0
      %s54 = sadd.s32 %s53, 1
      %s55 = scalar_select %p52, %s53, %s54
      %p58 = pneg %p52
      %p59 = scmp.eq.s32.totalorder %s17, 1
      %p60 = por %p58, %p59
      %p61 = scmp.ne.s32.totalorder %s53, %s56
      %p62 = scmp.eq.s32.totalorder %s17, 0
      %p63 = por %p61, %p62
      %p64 = scmp.ne.s32.totalorder %s53, %s56
      %p65 = scmp.eq.s32.totalorder %s22, 1
      %p66 = por %p64, %p65
      %p67 = scmp.ne.s32.totalorder %s56, %s57
      %p68 = scmp.eq.s32.totalorder %s22, 0
      %p69 = por %p67, %p68
      %p70 = scmp.ne.s32.totalorder %s56, %s57
      %p71 = scmp.eq.s32.totalorder %s23, 1
      %p72 = por %p70, %p71
      %p74 = scmp.ne.s32.totalorder %s57, %s73
      %p75 = scmp.eq.s32.totalorder %s23, 0
      %p76 = por %p74, %p75
      %s77 = ssub.s32 %s17, %s24
      %p78 = scmp.eq.s32.totalorder %s77, 0
      %s80 = sadd.s32 %s79, 1
      %s81 = scalar_select %p78, %s79, %s80
      %p84 = pneg %p78
      %p85 = scmp.eq.s32.totalorder %s17, 1
      %p86 = por %p84, %p85
      %p87 = scmp.ne.s32.totalorder %s79, %s82
      %p88 = scmp.eq.s32.totalorder %s17, 0
      %p89 = por %p87, %p88
      %p90 = scmp.ne.s32.totalorder %s79, %s82
      %p91 = scmp.eq.s32.totalorder %s22, 1
      %p92 = por %p90, %p91
      %p93 = scmp.ne.s32.totalorder %s82, %s83
      %p94 = scmp.eq.s32.totalorder %s22, 0
      %p95 = por %p93, %p94
      %p96 = scmp.ne.s32.totalorder %s82, %s83
      %p97 = scmp.eq.s32.totalorder %s23, 1
      %p98 = por %p96, %p97
      %p100 = scmp.ne.s32.totalorder %s83, %s99
      %p101 = scmp.eq.s32.totalorder %s23, 0
      %p102 = por %p100, %p101
      %p103 = scmp.le.s32.totalorder 1, %s17
      %p104 = scmp.lt.s32.totalorder %s17, 3
      %p105 = pnand %p103, %p104
      %p106 = pneg %p105
      // Predicated region
      $region9: #{tpu_custom_call.1} parent=5 // pred_check
        _
      $region10: #{tpu_custom_call.1} parent=5 // pred_check_branch
        %108 = sbr.rel (%p105) target = $region12
      $region11: #{tpu_custom_call.1} parent=5 // pred_region
        %s109 = ssub.s32 %s17, 1
      $region12: #{tpu_custom_call.1} parent=5 // pred_fallthru
        _
      %p110 = scmp.lt.s32.totalorder %s17, 2
      // Predicated region
      $region13: #{tpu_custom_call.1} parent=5 // pred_check
        %p111 = pneg %p110
      $region14: #{tpu_custom_call.1} parent=5 // pred_check_branch
        %113 = sbr.rel (%p111) target = $region16
      $region15: #{tpu_custom_call.1} parent=5 // pred_region
        // Predicated region
        $region17: #{tpu_custom_call.1} parent=15 // pred_check
          %p114 = pneg %p37
        $region18: #{tpu_custom_call.1} parent=15 // pred_check_branch
          %116 = sbr.rel (%p114) target = $region20
        $region19: #{tpu_custom_call.1} parent=15 // pred_region
          %s117 = sand.u32 %s27, 1
          %s118 = scalar_lea.sflag [#allocation3], %s117
          %s119 = sand.u32 %s27, 1
          %s120 = smul.addr %s119, 8
          %s121 = scalar_lea.vmem [#allocation2], %s120
          %123 = vsyncadd %s118, 0
          %s124 = smul.addr %s17, 8
          %s125 = scalar_lea.hbm %s0, %s124
          %s127 = sshll.u32 %s125, 4
          %s128 = int_to_ptr.hbm [resolvable:$true] %s127
          %s129 = sshll.u32 %s121, 4
          %s130 = int_to_ptr.vmem [resolvable:$true] %s129
          %132 = dma.hbm_to_vmem [thread:$0]  %s128, 128, %s130, %s118
        $region20: #{tpu_custom_call.1} parent=15 // pred_fallthru
          _
        // Predicated region
        $region21: #{tpu_custom_call.1} parent=15 // pred_check
          %p133 = pneg %p63
        $region22: #{tpu_custom_call.1} parent=15 // pred_check_branch
          %135 = sbr.rel (%p133) target = $region24
        $region23: #{tpu_custom_call.1} parent=15 // pred_region
          %s136 = sand.u32 %s53, 1
          %s137 = scalar_lea.sflag [#allocation6], %s136
          %s138 = sand.u32 %s53, 1
          %s139 = smul.addr %s138, 8
          %s140 = scalar_lea.vmem [#allocation5], %s139
          %142 = vsyncadd %s137, 0
          %s143 = smul.addr %s17, 8
          %s144 = scalar_lea.hbm %s1, %s143
          %s146 = sshll.u32 %s144, 4
          %s147 = int_to_ptr.hbm [resolvable:$true] %s146
          %s148 = sshll.u32 %s140, 4
          %s149 = int_to_ptr.vmem [resolvable:$true] %s148
          %151 = dma.hbm_to_vmem [thread:$0]  %s147, 128, %s149, %s137
        $region24: #{tpu_custom_call.1} parent=15 // pred_fallthru
          _
      $region16: #{tpu_custom_call.1} parent=5 // pred_fallthru
        _
      %p152 = scmp.le.s32.totalorder 1, %s17
      %p153 = scmp.lt.s32.totalorder %s17, 3
      %p154 = pnand %p152, %p153
      %p155 = pneg %p154
      // Predicated region
      $region25: #{tpu_custom_call.1} parent=5 // pred_check
        _
      $region26: #{tpu_custom_call.1} parent=5 // pred_check_branch
        %157 = sbr.rel (%p154) target = $region28
      $region27: #{tpu_custom_call.1} parent=5 // pred_region
        %s158 = ssub.s32 %s17, 1
        %s159 = sand.u32 %s30, 1
        %s160 = scalar_lea.sflag [#allocation3], %s159
        %s161 = sand.u32 %s30, 1
        %s162 = smul.addr %s161, 8
        %s163 = scalar_lea.vmem [#allocation2], %s162
        // Predicated region
        $region29: #{tpu_custom_call.1} parent=27 // pred_check
          %p164 = pneg %p43
        $region30: #{tpu_custom_call.1} parent=27 // pred_check_branch
          %166 = sbr.rel (%p164) target = $region32
        $region31: #{tpu_custom_call.1} parent=27 // pred_region
          %168 = dma.done %s160, 128
        $region32: #{tpu_custom_call.1} parent=27 // pred_fallthru
          _
        %s169 = sand.u32 %s56, 1
        %s170 = scalar_lea.sflag [#allocation6], %s169
        %s171 = sand.u32 %s56, 1
        %s172 = smul.addr %s171, 8
        %s173 = scalar_lea.vmem [#allocation5], %s172
        // Predicated region
        $region33: #{tpu_custom_call.1} parent=27 // pred_check
          %p174 = pneg %p69
        $region34: #{tpu_custom_call.1} parent=27 // pred_check_branch
          %176 = sbr.rel (%p174) target = $region36
        $region35: #{tpu_custom_call.1} parent=27 // pred_region
          %178 = dma.done %s170, 128
        $region36: #{tpu_custom_call.1} parent=27 // pred_fallthru
          _
        %s179 = sand.u32 %s30, 1
        %s180 = scalar_lea.sflag [#allocation3], %s179
        %s181 = sand.u32 %s30, 1
        %s182 = smul.addr %s181, 8
        %s183 = scalar_lea.vmem [#allocation2], %s182
        %p184 = pneg %p43
        %p185 = pneg %p40
        %s186 = sand.u32 %s56, 1
        %s187 = scalar_lea.sflag [#allocation6], %s186
        %s188 = sand.u32 %s56, 1
        %s189 = smul.addr %s188, 8
        %s190 = scalar_lea.vmem [#allocation5], %s189
        %p191 = pneg %p69
        %p192 = pneg %p66
        %p193 = pneg %p95
        %p194 = pneg %p92
        %s195 = sand.u32 %s82, 1
        %s196 = scalar_lea.sflag [#allocation4], %s195
        %s197 = sand.u32 %s82, 1
        %s198 = smul.addr %s197, 8
        %s199 = scalar_lea.vmem [#allocation7], %s198
        %v200 = vld [vmem:[%s163] sm:$0xff]
        %v201 = vld [vmem:[%s173] sm:$0xff]
        %v202 = vand.u32 2147483647, %v200
        %v203 = vsub.f32 0.0, %v202
        %v204 = vmul.f32 %v203, 1.442695
        %v205 = vpow.pop %v204
        %v206 = vmul.f32 %v200, %v201
        %v207 = vsub.f32 %v200, %v206
        %v208 = vsub.f32 0.0, %v200
        %v209 = vmax.f32 %v208, 0.0
        %v210 = vadd.f32 %v207, %v209
        %v211 = vadd.f32 %v205, 1.0
        %v212 = vlog2.pop %v211
        %v213 = vmul.f32 %v212, 0.6931472
        %v214 = vmul.f32 -0.5, %v205
        %v215 = vadd.f32 %v214, 1.0
        %v216 = vmul.f32 %v215, %v205
        %v217 = vand.u32 2147483647, %v205
        %vm218 = vcmp.lt.f32.partialorder %v217, 0.0004427343
        %v219 = vsel %vm218, %v216, %v213
        %v220 = vadd.f32 %v210, %v219
        %v221 = vmul.f32 %v201, 2.0
        %v222 = vsub.f32 %v221, 1.0
        %v223 = vmul.f32 %v208, %v222
        %v224 = vand.u32 2147483647, %v223
        %v225 = vsub.f32 0.0, %v224
        %v226 = vmul.f32 %v225, 1.442695
        %v227 = vpow.pop %v226
        %v228 = vadd.f32 %v227, 1.0
        %v229 = vrcp.pop %v228
        %vm230 = vcmp.gt.f32.partialorder %v223, 0.0
        %v231 = vmul.f32 %v227, %v229
        %v232 = vsel %vm230, %v229, %v231
        %v233 = vmul.f32 %v232, %v232
        %v234 = vmul.f32 %v233, %v220
        %v235 = vadd.f32 %v234, 0.0
        %236 = vst [vmem:[%s199] sm:$0xff] %v235
        %s237 = sand.u32 %s82, 1
        %s238 = scalar_lea.sflag [#allocation4], %s237
        %s239 = sand.u32 %s82, 1
        %s240 = smul.addr %s239, 8
        %s241 = scalar_lea.vmem [#allocation7], %s240
        // Predicated region
        $region37: #{tpu_custom_call.1} parent=27 // pred_check
          %p242 = pneg %p92
        $region38: #{tpu_custom_call.1} parent=27 // pred_check_branch
          %244 = sbr.rel (%p242) target = $region40
        $region39: #{tpu_custom_call.1} parent=27 // pred_region
          %246 = vsyncadd %s238, 0
          %s247 = smul.addr %s22, 8
          %s248 = scalar_lea.hbm %s2, %s247
          %s250 = sshll.u32 %s241, 4
          %s251 = int_to_ptr.vmem [resolvable:$true] %s250
          %s252 = sshll.u32 %s248, 4
          %s253 = int_to_ptr.hbm [resolvable:$true] %s252
          %255 = dma.vmem_to_hbm [thread:$0]  %s251, 128, %s253, %s238
        $region40: #{tpu_custom_call.1} parent=27 // pred_fallthru
          _
      $region28: #{tpu_custom_call.1} parent=5 // pred_fallthru
        _
      %p256 = scmp.le.s32.totalorder 2, %s17
      // Predicated region
      $region41: #{tpu_custom_call.1} parent=5 // pred_check
        %p257 = pneg %p256
      $region42: #{tpu_custom_call.1} parent=5 // pred_check_branch
        %259 = sbr.rel (%p257) target = $region44
      $region43: #{tpu_custom_call.1} parent=5 // pred_region
        %s260 = ssub.s32 %s17, 2
        // Predicated region
        $region45: #{tpu_custom_call.1} parent=43 // pred_check
          %p261 = pneg %p98
        $region46: #{tpu_custom_call.1} parent=43 // pred_check_branch
          %263 = sbr.rel (%p261) target = $region48
        $region47: #{tpu_custom_call.1} parent=43 // pred_region
          %s264 = sand.u32 %s83, 1
          %s265 = scalar_lea.sflag [#allocation4], %s264
          %s266 = sand.u32 %s83, 1
          %s267 = smul.addr %s266, 8
          %s268 = scalar_lea.vmem [#allocation7], %s267
          %270 = dma.done %s265, 128
        $region48: #{tpu_custom_call.1} parent=43 // pred_fallthru
          _
      $region44: #{tpu_custom_call.1} parent=5 // pred_fallthru
        _
    $region6: #{tpu_custom_call.1} parent=1 // loop_footer
      %s21 = sadd.s32 1, %s17
    $region7: #{tpu_custom_call.1} parent=1 // loop_footer_branch
      %16 = sbr.rel target = $region3
    $region8: #{tpu_custom_call.1} parent=1 // loop_exit
      _
    %271 = vsyncpa [#allocation3], 1
    %s272 = scalar_lea.sflag [#allocation3], 1
    %273 = vsyncpa %s272, 1
    %274 = vsyncpa [#allocation6], 1
    %s275 = scalar_lea.sflag [#allocation6], 1
    %276 = vsyncpa %s275, 1
    %277 = vsyncpa [#allocation4], 1
    %s278 = scalar_lea.sflag [#allocation4], 1
    %279 = vsyncpa %s278, 1

</llo_original>
